<compile_context>
chip_gen: v5e
topology: v5e:2x2
jax: 0.10.0
libtpu: 0.0.40
codegen_flags: <defaults>
</compile_context>

<pallas_src>
import functools
import math

import jax
import jax.numpy as jnp
from jax.experimental import pallas as pl
from jax.experimental.pallas import tpu as pltpu

INPUT_FEAT = 300           # len(X_train[0]) == word2vec dimension
HIDDEN = (128, 64, 32)
BN_EPS = 1e-5


def _round_up(n, m):
    return (n + m - 1) // m * m


# ----------------------------- kernel ---------------------------------------
def mlp_kernel(x_ref,
               w1_ref, b1_ref,
               w2_ref, b2_ref,
               w3_ref, b3_ref,
               w4_ref, b4_ref,
               o_ref):
    # bf16 cast on the VPU (free: kernel is input-DMA bound). No-op if x is bf16.
    x = x_ref[...].astype(w1_ref.dtype)

    # Layer 1: relu(x @ W1 + b1)        (BN1 is folded into W2/b2)
    h = jnp.dot(x, w1_ref[...], preferred_element_type=jnp.float32) + b1_ref[...]
    h = jnp.maximum(h, 0.0)

    # Layer 2: relu(h @ W2' + b2')      (carries BN1; BN2 folded into W3/b3)
    h = jnp.dot(h.astype(w2_ref.dtype), w2_ref[...],
                preferred_element_type=jnp.float32) + b2_ref[...]
    h = jnp.maximum(h, 0.0)

    # Layer 3: relu(h @ W3' + b3')      (carries BN2; BN3 folded into W4/b4)
    h = jnp.dot(h.astype(w3_ref.dtype), w3_ref[...],
                preferred_element_type=jnp.float32) + b3_ref[...]
    h = jnp.maximum(h, 0.0)

    # Dropout (eval) is identity.  Output head 32 -> 1 on the VPU/XLU
    # (broadcast multiply + lane reduce) instead of an N=1 MXU pass.
    o_ref[...] = (jnp.sum(h * w4_ref[...], axis=-1, keepdims=True)
                  + b4_ref[...]).astype(o_ref.dtype)


# ------------------------ parameter preparation ------------------------------
def _fold_params(params, weight_dtype=jnp.bfloat16):
    """Fold eval-mode BatchNorm into the following linear layer.

    BN(y) = y*s + t with s = gamma*rsqrt(var+eps), t = beta - mean*s.
    Since BN output feeds the next Linear directly, fold s into the next
    layer's weight *rows* and add t @ W_next to its bias (exact in f32).
    """
    (w1, b1, g1, be1, m1, v1,
     w2, b2, g2, be2, m2, v2,
     w3, b3, g3, be3, m3, v3,
     w4, b4) = params

    def scale_shift(g, be, m, v):
        s = g * jax.lax.rsqrt(v + BN_EPS)
        return s, be - m * s

    s1, t1 = scale_shift(g1, be1, m1, v1)
    s2, t2 = scale_shift(g2, be2, m2, v2)
    s3, t3 = scale_shift(g3, be3, m3, v3)

    w2f = s1.reshape(-1, 1) * w2
    b2f = b2 + t1 @ w2
    w3f = s2.reshape(-1, 1) * w3
    b3f = b3 + t2 @ w3
    w4f = s3.reshape(-1, 1) * w4                             # (32, 1)
    b4f = b4 + t3 @ w4                                       # (1, 1)

    return (w1.astype(weight_dtype), b1,
            w2f.astype(weight_dtype), b2f,
            w3f.astype(weight_dtype), b3f,
            w4f.T.astype(weight_dtype), b4f)                 # W4 passed as (1, 32) row


# ------------------------------ wrapper --------------------------------------
@functools.partial(jax.jit, static_argnames=("block_b",))
def binary_classification_forward(x, params, *, block_b=2048):
    """x: [B, INPUT_FEAT] float32 or bfloat16.  params: flat list (see init_params)."""
    B, K = x.shape

    # Sublane granule for the x block: 8 rows for 4-byte dtypes, 16 for 2-byte.
    granule = max(8, 32 // jnp.dtype(x.dtype).itemsize)
    # Aim for >= 2 grid steps whenever B allows so ("parallel",) can shard the
    # batch tiles across both TensorCores on v7x (no-op on v5e/v6e).
    want_tiles = 2 if B >= 2 * granule else 1
    tb = min(_round_up(block_b, granule),
             _round_up(pl.cdiv(B, want_tiles), granule))
    grid = (pl.cdiv(B, tb),)          # partial last block handled by Pallas

    prep = _fold_params(params, jnp.bfloat16)

    def resident(a):
        # Constant block index across the batch grid => DMA'd once, stays
        # resident in VMEM for all grid steps.
        return pl.BlockSpec(a.shape, lambda *_, nd=a.ndim: (0,) * nd)

    out = pl.pallas_call(
        mlp_kernel,
        out_shape=jax.ShapeDtypeStruct((B, 1), jnp.float32),
        grid=grid,
        in_specs=[pl.BlockSpec((tb, K), lambda i: (i, 0))]     # K == full dim => (8,128)-OK
                 + [resident(a) for a in prep],
        out_specs=pl.BlockSpec((tb, 1), lambda i: (i, 0)),
        compiler_params=pltpu.CompilerParams(
            dimension_semantics=("parallel",),
            vmem_limit_bytes=32 * 1024 * 1024),   # tb=2048 uses ~10 MiB incl. double-buffer
    )(x, *prep)
    return out


# --------------------------- params & references ------------------------------
def init_params(key):
    """Deterministic synthetic parameters with PyTorch-default-like init."""
    dims = (INPUT_FEAT,) + HIDDEN + (1,)
    params = []
    keys = jax.random.split(key, 32)
    ki = 0

    def linear(fan_in, fan_out):
        nonlocal ki
        bound = 1.0 / math.sqrt(fan_in)
        w = jax.random.uniform(keys[ki], (fan_in, fan_out), jnp.float32, -bound, bound)
        b = jax.random.uniform(keys[ki + 1], (1, fan_out), jnp.float32, -bound, bound)
        ki += 2
        return w, b

    def batchnorm(n):
        nonlocal ki
        gamma = 1.0 + 0.1 * jax.random.normal(keys[ki], (1, n), jnp.float32)
        beta = 0.1 * jax.random.normal(keys[ki + 1], (1, n), jnp.float32)
        mean = 0.1 * jax.random.normal(keys[ki + 2], (1, n), jnp.float32)
        var = jnp.abs(1.0 + 0.1 * jax.random.normal(keys[ki + 3], (1, n), jnp.float32))
        ki += 4
        return gamma, beta, mean, var

    for li in range(3):
        w, b = linear(dims[li], dims[li + 1])
        g, be, m, v = batchnorm(dims[li + 1])
        params += [w, b, g, be, m, v]
    w4, b4 = linear(dims[3], dims[4])
    params += [w4, b4]
    return params


def _bn(h, gamma, beta, mean, var):
    return (h - mean) * jax.lax.rsqrt(var + BN_EPS) * gamma + beta


def reference_forward(x, params):
    """Plain-JAX f32 reference with the original (unfolded) eval semantics."""
    (w1, b1, g1, be1, m1, v1,
     w2, b2, g2, be2, m2, v2,
     w3, b3, g3, be3, m3, v3,
     w4, b4) = params
    h = _bn(jnp.maximum(x @ w1 + b1, 0.0), g1, be1, m1, v1)
    h = _bn(jnp.maximum(h @ w2 + b2, 0.0), g2, be2, m2, v2)
    h = _bn(jnp.maximum(h @ w3 + b3, 0.0), g3, be3, m3, v3)
    return h @ w4 + b4


def prepared_reference(x, prep):
    """Plain-JAX forward mirroring the kernel math exactly (folded params)."""
    w1, b1, w2, b2, w3, b3, w4row, b4 = prep
    h = jnp.maximum(jnp.dot(x.astype(w1.dtype), w1,
                            preferred_element_type=jnp.float32) + b1, 0.0)
    h = jnp.maximum(jnp.dot(h.astype(w2.dtype), w2,
                            preferred_element_type=jnp.float32) + b2, 0.0)
    h = jnp.maximum(jnp.dot(h.astype(w3.dtype), w3,
                            preferred_element_type=jnp.float32) + b3, 0.0)
    return jnp.sum(h * w4row, axis=-1, keepdims=True) + b4


# ---------------------------------- main --------------------------------------
if __name__ == "__main__":
    key = jax.random.PRNGKey(0)
    k_params, k_x = jax.random.split(key)

    # Modest deterministic example; real deployments batch in the thousands so
    # the tiled/pipelined grid pays off.
    B = 512
    x = jax.random.normal(k_x, (B, INPUT_FEAT), jnp.float32)
    params = init_params(k_params)

    # Multi-step grid path (tb=128 -> 4 pipelined steps).
    out = binary_classification_forward(x, params, block_b=128)
    out = jax.block_until_ready(out)
    assert out.shape == (B, 1)

    # 1) BN folding is exact: f32 folded forward matches original semantics.
    ref_orig = reference_forward(x, params)
    prep_f32 = _fold_params(params, jnp.float32)
    ref_folded = prepared_reference(x, prep_f32)
    assert jnp.allclose(ref_folded, ref_orig, atol=1e-4, rtol=1e-4), "BN folding mismatch"

    # 2) Pallas kernel matches the identical-math JAX forward (bf16 weights,
    #    in-kernel bf16 cast of x, f32 accumulation).
    prep_bf16 = _fold_params(params, jnp.bfloat16)
    ref_bf16 = prepared_reference(x, prep_bf16)
    assert jnp.allclose(out, ref_bf16, atol=2e-3, rtol=2e-3), "kernel mismatch vs reference"

    # 3) Default large-tile path (tb picked so the grid still has >=2 steps).
    out2 = jax.block_until_ready(binary_classification_forward(x, params))
    assert jnp.allclose(out2, ref_bf16, atol=2e-3, rtol=2e-3), "default-tile mismatch"

    print("KERNEL_OK")
</pallas_src>

<mosaic_0001>
module attributes {stable_mosaic.version = 11 : i64} {
  func.func @mlp_kernel(%arg0: i32, %arg1: memref<128x300xf32, #tpu.memory_space<vmem>>, %arg2: memref<300x128xbf16, #tpu.memory_space<vmem>>, %arg3: memref<1x128xf32, #tpu.memory_space<vmem>>, %arg4: memref<128x64xbf16, #tpu.memory_space<vmem>>, %arg5: memref<1x64xf32, #tpu.memory_space<vmem>>, %arg6: memref<64x32xbf16, #tpu.memory_space<vmem>>, %arg7: memref<1x32xf32, #tpu.memory_space<vmem>>, %arg8: memref<1x32xbf16, #tpu.memory_space<vmem>>, %arg9: memref<1x1xf32, #tpu.memory_space<vmem>>, %arg10: memref<128x1xf32, #tpu.memory_space<vmem>>) attributes {dimension_semantics = [#tpu.dimension_semantics<parallel>], iteration_bounds = array<i64: 4>, scalar_prefetch = 0 : i64, scratch_operands = 0 : i64, tpu.core_type = #tpu.core_type<tc>, window_params = [{transform_indices = @transform_0, window_bounds = array<i64: 128, 300>}, {pipeline_mode = #tpu.pipeline_mode<synchronous>, transform_indices = @transform_1, window_bounds = array<i64: 300, 128>}, {pipeline_mode = #tpu.pipeline_mode<synchronous>, transform_indices = @transform_2, window_bounds = array<i64: 1, 128>}, {pipeline_mode = #tpu.pipeline_mode<synchronous>, transform_indices = @transform_3, window_bounds = array<i64: 128, 64>}, {pipeline_mode = #tpu.pipeline_mode<synchronous>, transform_indices = @transform_4, window_bounds = array<i64: 1, 64>}, {pipeline_mode = #tpu.pipeline_mode<synchronous>, transform_indices = @transform_5, window_bounds = array<i64: 64, 32>}, {pipeline_mode = #tpu.pipeline_mode<synchronous>, transform_indices = @transform_6, window_bounds = array<i64: 1, 32>}, {pipeline_mode = #tpu.pipeline_mode<synchronous>, transform_indices = @transform_7, window_bounds = array<i64: 1, 32>}, {pipeline_mode = #tpu.pipeline_mode<synchronous>, transform_indices = @transform_8, window_bounds = array<i64: 1, 1>}, {transform_indices = @transform_9, window_bounds = array<i64: 128, 1>}]} {
    %c0 = arith.constant 0 : index
    %c0_0 = arith.constant 0 : index
    %0 = vector.load %arg1[%c0, %c0_0] : memref<128x300xf32, #tpu.memory_space<vmem>>, vector<128x300xf32>
    %1 = arith.truncf %0 : vector<128x300xf32> to vector<128x300xbf16>
    %c0_1 = arith.constant 0 : index
    %c0_2 = arith.constant 0 : index
    %2 = vector.load %arg2[%c0_1, %c0_2] : memref<300x128xbf16, #tpu.memory_space<vmem>>, vector<300x128xbf16>
    %cst = arith.constant dense<0.000000e+00> : vector<128x128xf32>
    %3 = tpu.matmul %1, %2, %cst {dimension_numbers = #tpu.dot_dimension_numbers<[1], [0], [0], [1], [0, 0, 1, 1], [], []>} : vector<128x300xbf16>, vector<300x128xbf16>, vector<128x128xf32> -> vector<128x128xf32>
    %c0_3 = arith.constant 0 : index
    %c0_4 = arith.constant 0 : index
    %4 = vector.load %arg3[%c0_3, %c0_4] : memref<1x128xf32, #tpu.memory_space<vmem>>, vector<1x128xf32>
    %5 = vector.broadcast %4 : vector<1x128xf32> to vector<128x128xf32>
    %6 = arith.addf %3, %5 : vector<128x128xf32>
    %cst_5 = arith.constant 0.000000e+00 : f32
    %7 = vector.broadcast %cst_5 : f32 to vector<128x128xf32>
    %8 = arith.maximumf %6, %7 : vector<128x128xf32>
    %9 = arith.truncf %8 : vector<128x128xf32> to vector<128x128xbf16>
    %c0_6 = arith.constant 0 : index
    %c0_7 = arith.constant 0 : index
    %10 = vector.load %arg4[%c0_6, %c0_7] : memref<128x64xbf16, #tpu.memory_space<vmem>>, vector<128x64xbf16>
    %cst_8 = arith.constant dense<0.000000e+00> : vector<128x64xf32>
    %11 = tpu.matmul %9, %10, %cst_8 {dimension_numbers = #tpu.dot_dimension_numbers<[1], [0], [0], [1], [0, 0, 1, 1], [], []>} : vector<128x128xbf16>, vector<128x64xbf16>, vector<128x64xf32> -> vector<128x64xf32>
    %c0_9 = arith.constant 0 : index
    %c0_10 = arith.constant 0 : index
    %12 = vector.load %arg5[%c0_9, %c0_10] : memref<1x64xf32, #tpu.memory_space<vmem>>, vector<1x64xf32>
    %13 = vector.broadcast %12 : vector<1x64xf32> to vector<128x64xf32>
    %14 = arith.addf %11, %13 : vector<128x64xf32>
    %cst_11 = arith.constant 0.000000e+00 : f32
    %15 = vector.broadcast %cst_11 : f32 to vector<128x64xf32>
    %16 = arith.maximumf %14, %15 : vector<128x64xf32>
    %17 = arith.truncf %16 : vector<128x64xf32> to vector<128x64xbf16>
    %c0_12 = arith.constant 0 : index
    %c0_13 = arith.constant 0 : index
    %18 = vector.load %arg6[%c0_12, %c0_13] : memref<64x32xbf16, #tpu.memory_space<vmem>>, vector<64x32xbf16>
    %cst_14 = arith.constant dense<0.000000e+00> : vector<128x32xf32>
    %19 = tpu.matmul %17, %18, %cst_14 {dimension_numbers = #tpu.dot_dimension_numbers<[1], [0], [0], [1], [0, 0, 1, 1], [], []>} : vector<128x64xbf16>, vector<64x32xbf16>, vector<128x32xf32> -> vector<128x32xf32>
    %c0_15 = arith.constant 0 : index
    %c0_16 = arith.constant 0 : index
    %20 = vector.load %arg7[%c0_15, %c0_16] : memref<1x32xf32, #tpu.memory_space<vmem>>, vector<1x32xf32>
    %21 = vector.broadcast %20 : vector<1x32xf32> to vector<128x32xf32>
    %22 = arith.addf %19, %21 : vector<128x32xf32>
    %cst_17 = arith.constant 0.000000e+00 : f32
    %23 = vector.broadcast %cst_17 : f32 to vector<128x32xf32>
    %24 = arith.maximumf %22, %23 : vector<128x32xf32>
    %c0_18 = arith.constant 0 : index
    %c0_19 = arith.constant 0 : index
    %25 = vector.load %arg8[%c0_18, %c0_19] : memref<1x32xbf16, #tpu.memory_space<vmem>>, vector<1x32xbf16>
    %26 = arith.extf %25 : vector<1x32xbf16> to vector<1x32xf32>
    %27 = vector.broadcast %26 : vector<1x32xf32> to vector<128x32xf32>
    %28 = arith.mulf %24, %27 : vector<128x32xf32>
    %cst_20 = arith.constant dense<0.000000e+00> : vector<128xf32>
    %29 = vector.multi_reduction <add>, %28, %cst_20 [1] : vector<128x32xf32> to vector<128xf32>
    %30 = vector.shape_cast %29 : vector<128xf32> to vector<128x1xf32>
    %c0_21 = arith.constant 0 : index
    %c0_22 = arith.constant 0 : index
    %31 = vector.load %arg9[%c0_21, %c0_22] : memref<1x1xf32, #tpu.memory_space<vmem>>, vector<1x1xf32>
    %32 = vector.broadcast %31 : vector<1x1xf32> to vector<128x1xf32>
    %33 = arith.addf %30, %32 : vector<128x1xf32>
    %c0_23 = arith.constant 0 : index
    %c0_24 = arith.constant 0 : index
    %34 = vector.load %arg10[%c0_23, %c0_24] : memref<128x1xf32, #tpu.memory_space<vmem>>, vector<128x1xf32>
    tpu.vector_store %arg10[%c0_23, %c0_24], %33 {strides = array<i32>} : memref<128x1xf32, #tpu.memory_space<vmem>>, vector<128x1xf32>,
    return
  }
  func.func @transform_0(%arg0: i32) -> (i32, i32) {
    %c0_i32 = arith.constant 0 : i32
    %c0_i32_0 = arith.constant 0 : i32
    return %arg0, %c0_i32 : i32, i32
  }
  func.func @transform_1(%arg0: i32) -> (i32, i32) {
    %c0_i32 = arith.constant 0 : i32
    %c0_i32_0 = arith.constant 0 : i32
    %c0_i32_1 = arith.constant 0 : i32
    return %c0_i32, %c0_i32_0 : i32, i32
  }
  func.func @transform_2(%arg0: i32) -> (i32, i32) {
    %c0_i32 = arith.constant 0 : i32
    %c0_i32_0 = arith.constant 0 : i32
    %c0_i32_1 = arith.constant 0 : i32
    return %c0_i32, %c0_i32_0 : i32, i32
  }
  func.func @transform_3(%arg0: i32) -> (i32, i32) {
    %c0_i32 = arith.constant 0 : i32
    %c0_i32_0 = arith.constant 0 : i32
    %c0_i32_1 = arith.constant 0 : i32
    return %c0_i32, %c0_i32_0 : i32, i32
  }
  func.func @transform_4(%arg0: i32) -> (i32, i32) {
    %c0_i32 = arith.constant 0 : i32
    %c0_i32_0 = arith.constant 0 : i32
    %c0_i32_1 = arith.constant 0 : i32
    return %c0_i32, %c0_i32_0 : i32, i32
  }
  func.func @transform_5(%arg0: i32) -> (i32, i32) {
    %c0_i32 = arith.constant 0 : i32
    %c0_i32_0 = arith.constant 0 : i32
    %c0_i32_1 = arith.constant 0 : i32
    return %c0_i32, %c0_i32_0 : i32, i32
  }
  func.func @transform_6(%arg0: i32) -> (i32, i32) {
    %c0_i32 = arith.constant 0 : i32
    %c0_i32_0 = arith.constant 0 : i32
    %c0_i32_1 = arith.constant 0 : i32
    return %c0_i32, %c0_i32_0 : i32, i32
  }
  func.func @transform_7(%arg0: i32) -> (i32, i32) {
    %c0_i32 = arith.constant 0 : i32
    %c0_i32_0 = arith.constant 0 : i32
    %c0_i32_1 = arith.constant 0 : i32
    return %c0_i32, %c0_i32_0 : i32, i32
  }
  func.func @transform_8(%arg0: i32) -> (i32, i32) {
    %c0_i32 = arith.constant 0 : i32
    %c0_i32_0 = arith.constant 0 : i32
    %c0_i32_1 = arith.constant 0 : i32
    return %c0_i32, %c0_i32_0 : i32, i32
  }
  func.func @transform_9(%arg0: i32) -> (i32, i32) {
    %c0_i32 = arith.constant 0 : i32
    %c0_i32_0 = arith.constant 0 : i32
    return %arg0, %c0_i32 : i32, i32
  }
}

</mosaic_0001>

<llo_original>
// kernel: binary_classification_forward.1
$region0: #{binary_classification_forward.1}
  #allocation0 [shape = 'u32[]', space=smem, size = 0x4, offset = 0x4, fixed_abs, tag = 'smem constant byte address 0x4 - core index']
  #allocation1 [shape = 'u32[72,128]{1,0:T(1,128)}', space=vmem, size = 0x9000, scoped, tag = 'internal scratch']
  #allocation2 [shape = 'f32[1,1]{1,0:T(1,128)S(1)}', space=vmem, size = 0x200, scoped, tag = 'scoped memory for binary_classification_forward.1']
  %s0 = inlined_call_operand.vmem [shape: f32[512,300], index: 0, kind: input, shape index: {}]
  %s1 = inlined_call_operand.vmem [shape: bf16[300,128], index: 1, kind: input, shape index: {}]
  %s2 = inlined_call_operand.vmem [shape: f32[1,128], index: 2, kind: input, shape index: {}]
  %s3 = inlined_call_operand.vmem [shape: bf16[128,64], index: 3, kind: input, shape index: {}]
  %s4 = inlined_call_operand.vmem [shape: f32[1,64], index: 4, kind: input, shape index: {}]
  %s5 = inlined_call_operand.vmem [shape: bf16[64,32], index: 5, kind: input, shape index: {}]
  %s6 = inlined_call_operand.vmem [shape: f32[1,32], index: 6, kind: input, shape index: {}]
  %s7 = inlined_call_operand.vmem [shape: bf16[1,32], index: 7, kind: input, shape index: {}]
  %s8 = inlined_call_operand.<no memory space> [shape: f32[1,1], index: 8, kind: input, shape index: {}]
  %s9 = inlined_call_operand.vmem [shape: f32[512,1], index: 9, kind: output, shape index: {}]
  %s10 = sld [smem:[#allocation0]]
  $region69: #{binary_classification_forward.1} parent=0
    _
  %s12 = ssub.s32 1, %s10
  %s13 = scalar_select 0, %s12, %s10
  %v14 = vstv %s8
  %15 = vst [vmem:[#allocation2] sm:$0x1] %v14
  loop: start=0, step=1, limit=6
  $region2: #{binary_classification_forward.1} parent=0 // loop_pre_header
    _
  $region3: #{binary_classification_forward.1} parent=0 // loop_header
    %s17 = sphi 0, %s21
    %p18 = scmp.ge.s32.totalorder %s17, 6
    %s27 = sphi 0, %s29
    %s30 = sphi 0, %s27
    %s31 = sphi 0, %s30
    %s47 = sphi 0, %s31
    %s51 = sphi 0, %s51
    %s53 = sphi 0, %s51
    %s54 = sphi 0, %s53
    %s68 = sphi 0, %s54
    %s72 = sphi 0, %s72
    %s74 = sphi 0, %s72
    %s75 = sphi 0, %s74
    %s89 = sphi 0, %s75
    %s93 = sphi 0, %s93
    %s95 = sphi 0, %s93
    %s96 = sphi 0, %s95
    %s110 = sphi 0, %s96
    %s114 = sphi 0, %s114
    %s116 = sphi 0, %s114
    %s117 = sphi 0, %s116
    %s131 = sphi 0, %s117
    %s135 = sphi 0, %s135
    %s137 = sphi 0, %s135
    %s138 = sphi 0, %s137
    %s152 = sphi 0, %s138
    %s156 = sphi 0, %s156
    %s158 = sphi 0, %s156
    %s159 = sphi 0, %s158
    %s173 = sphi 0, %s159
    %s177 = sphi 0, %s177
    %s179 = sphi 0, %s177
    %s180 = sphi 0, %s179
    %s194 = sphi 0, %s180
    %s198 = sphi 0, %s198
    %s200 = sphi 0, %s198
    %s201 = sphi 0, %s200
    %s215 = sphi 0, %s201
    %s221 = sphi 0, %s223
    %s224 = sphi 0, %s221
    %s225 = sphi 0, %s224
    %s241 = sphi 0, %s225
  $region4: #{binary_classification_forward.1} parent=0 // loop_header_branch
    %20 = sbr.rel (%p18) target = $region8
  $region5: #{binary_classification_forward.1} parent=0 // loop_body
    %s22 = ssub.s32 %s17, 1
    %s23 = ssub.s32 %s17, 2
    %s24 = sadd.s32 %s17, 1
    %s25 = ssub.s32 %s17, %s24
    %p26 = scmp.eq.s32.totalorder %s25, 0
    %s28 = sadd.s32 %s27, 1
    %s29 = scalar_select %p26, %s27, %s28
    %p32 = pneg %p26
    %p33 = scmp.eq.s32.totalorder %s17, 3
    %p34 = por %p32, %p33
    %p35 = scmp.ne.s32.totalorder %s27, %s30
    %p36 = scmp.eq.s32.totalorder %s17, 0
    %p37 = por %p35, %p36
    %p38 = scmp.ne.s32.totalorder %s27, %s30
    %p39 = scmp.eq.s32.totalorder %s22, 3
    %p40 = por %p38, %p39
    %p41 = scmp.ne.s32.totalorder %s30, %s31
    %p42 = scmp.eq.s32.totalorder %s22, 0
    %p43 = por %p41, %p42
    %p44 = scmp.ne.s32.totalorder %s30, %s31
    %p45 = scmp.eq.s32.totalorder %s23, 3
    %p46 = por %p44, %p45
    %p48 = scmp.ne.s32.totalorder %s31, %s47
    %p49 = scmp.eq.s32.totalorder %s23, 0
    %p50 = por %p48, %p49
    %s52 = sadd.s32 %s51, 1
    %p55 = scmp.eq.s32.totalorder %s17, 3
    %p56 = scmp.ne.s32.totalorder %s51, %s53
    %p57 = scmp.eq.s32.totalorder %s17, 0
    %p58 = por %p56, %p57
    %p59 = scmp.ne.s32.totalorder %s51, %s53
    %p60 = scmp.eq.s32.totalorder %s22, 3
    %p61 = por %p59, %p60
    %p62 = scmp.ne.s32.totalorder %s53, %s54
    %p63 = scmp.eq.s32.totalorder %s22, 0
    %p64 = por %p62, %p63
    %p65 = scmp.ne.s32.totalorder %s53, %s54
    %p66 = scmp.eq.s32.totalorder %s23, 3
    %p67 = por %p65, %p66
    %p69 = scmp.ne.s32.totalorder %s54, %s68
    %p70 = scmp.eq.s32.totalorder %s23, 0
    %p71 = por %p69, %p70
    %s73 = sadd.s32 %s72, 1
    %p76 = scmp.eq.s32.totalorder %s17, 3
    %p77 = scmp.ne.s32.totalorder %s72, %s74
    %p78 = scmp.eq.s32.totalorder %s17, 0
    %p79 = por %p77, %p78
    %p80 = scmp.ne.s32.totalorder %s72, %s74
    %p81 = scmp.eq.s32.totalorder %s22, 3
    %p82 = por %p80, %p81
    %p83 = scmp.ne.s32.totalorder %s74, %s75
    %p84 = scmp.eq.s32.totalorder %s22, 0
    %p85 = por %p83, %p84
    %p86 = scmp.ne.s32.totalorder %s74, %s75
    %p87 = scmp.eq.s32.totalorder %s23, 3
    %p88 = por %p86, %p87
    %p90 = scmp.ne.s32.totalorder %s75, %s89
    %p91 = scmp.eq.s32.totalorder %s23, 0
    %p92 = por %p90, %p91
    %s94 = sadd.s32 %s93, 1
    %p97 = scmp.eq.s32.totalorder %s17, 3
    %p98 = scmp.ne.s32.totalorder %s93, %s95
    %p99 = scmp.eq.s32.totalorder %s17, 0
    %p100 = por %p98, %p99
    %p101 = scmp.ne.s32.totalorder %s93, %s95
    %p102 = scmp.eq.s32.totalorder %s22, 3
    %p103 = por %p101, %p102
    %p104 = scmp.ne.s32.totalorder %s95, %s96
    %p105 = scmp.eq.s32.totalorder %s22, 0
    %p106 = por %p104, %p105
    %p107 = scmp.ne.s32.totalorder %s95, %s96
    %p108 = scmp.eq.s32.totalorder %s23, 3
    %p109 = por %p107, %p108
    %p111 = scmp.ne.s32.totalorder %s96, %s110
    %p112 = scmp.eq.s32.totalorder %s23, 0
    %p113 = por %p111, %p112
    %s115 = sadd.s32 %s114, 1
    %p118 = scmp.eq.s32.totalorder %s17, 3
    %p119 = scmp.ne.s32.totalorder %s114, %s116
    %p120 = scmp.eq.s32.totalorder %s17, 0
    %p121 = por %p119, %p120
    %p122 = scmp.ne.s32.totalorder %s114, %s116
    %p123 = scmp.eq.s32.totalorder %s22, 3
    %p124 = por %p122, %p123
    %p125 = scmp.ne.s32.totalorder %s116, %s117
    %p126 = scmp.eq.s32.totalorder %s22, 0
    %p127 = por %p125, %p126
    %p128 = scmp.ne.s32.totalorder %s116, %s117
    %p129 = scmp.eq.s32.totalorder %s23, 3
    %p130 = por %p128, %p129
    %p132 = scmp.ne.s32.totalorder %s117, %s131
    %p133 = scmp.eq.s32.totalorder %s23, 0
    %p134 = por %p132, %p133
    %s136 = sadd.s32 %s135, 1
    %p139 = scmp.eq.s32.totalorder %s17, 3
    %p140 = scmp.ne.s32.totalorder %s135, %s137
    %p141 = scmp.eq.s32.totalorder %s17, 0
    %p142 = por %p140, %p141
    %p143 = scmp.ne.s32.totalorder %s135, %s137
    %p144 = scmp.eq.s32.totalorder %s22, 3
    %p145 = por %p143, %p144
    %p146 = scmp.ne.s32.totalorder %s137, %s138
    %p147 = scmp.eq.s32.totalorder %s22, 0
    %p148 = por %p146, %p147
    %p149 = scmp.ne.s32.totalorder %s137, %s138
    %p150 = scmp.eq.s32.totalorder %s23, 3
    %p151 = por %p149, %p150
    %p153 = scmp.ne.s32.totalorder %s138, %s152
    %p154 = scmp.eq.s32.totalorder %s23, 0
    %p155 = por %p153, %p154
    %s157 = sadd.s32 %s156, 1
    %p160 = scmp.eq.s32.totalorder %s17, 3
    %p161 = scmp.ne.s32.totalorder %s156, %s158
    %p162 = scmp.eq.s32.totalorder %s17, 0
    %p163 = por %p161, %p162
    %p164 = scmp.ne.s32.totalorder %s156, %s158
    %p165 = scmp.eq.s32.totalorder %s22, 3
    %p166 = por %p164, %p165
    %p167 = scmp.ne.s32.totalorder %s158, %s159
    %p168 = scmp.eq.s32.totalorder %s22, 0
    %p169 = por %p167, %p168
    %p170 = scmp.ne.s32.totalorder %s158, %s159
    %p171 = scmp.eq.s32.totalorder %s23, 3
    %p172 = por %p170, %p171
    %p174 = scmp.ne.s32.totalorder %s159, %s173
    %p175 = scmp.eq.s32.totalorder %s23, 0
    %p176 = por %p174, %p175
    %s178 = sadd.s32 %s177, 1
    %p181 = scmp.eq.s32.totalorder %s17, 3
    %p182 = scmp.ne.s32.totalorder %s177, %s179
    %p183 = scmp.eq.s32.totalorder %s17, 0
    %p184 = por %p182, %p183
    %p185 = scmp.ne.s32.totalorder %s177, %s179
    %p186 = scmp.eq.s32.totalorder %s22, 3
    %p187 = por %p185, %p186
    %p188 = scmp.ne.s32.totalorder %s179, %s180
    %p189 = scmp.eq.s32.totalorder %s22, 0
    %p190 = por %p188, %p189
    %p191 = scmp.ne.s32.totalorder %s179, %s180
    %p192 = scmp.eq.s32.totalorder %s23, 3
    %p193 = por %p191, %p192
    %p195 = scmp.ne.s32.totalorder %s180, %s194
    %p196 = scmp.eq.s32.totalorder %s23, 0
    %p197 = por %p195, %p196
    %s199 = sadd.s32 %s198, 1
    %p202 = scmp.eq.s32.totalorder %s17, 3
    %p203 = scmp.ne.s32.totalorder %s198, %s200
    %p204 = scmp.eq.s32.totalorder %s17, 0
    %p205 = por %p203, %p204
    %p206 = scmp.ne.s32.totalorder %s198, %s200
    %p207 = scmp.eq.s32.totalorder %s22, 3
    %p208 = por %p206, %p207
    %p209 = scmp.ne.s32.totalorder %s200, %s201
    %p210 = scmp.eq.s32.totalorder %s22, 0
    %p211 = por %p209, %p210
    %p212 = scmp.ne.s32.totalorder %s200, %s201
    %p213 = scmp.eq.s32.totalorder %s23, 3
    %p214 = por %p212, %p213
    %p216 = scmp.ne.s32.totalorder %s201, %s215
    %p217 = scmp.eq.s32.totalorder %s23, 0
    %p218 = por %p216, %p217
    %s219 = ssub.s32 %s17, %s24
    %p220 = scmp.eq.s32.totalorder %s219, 0
    %s222 = sadd.s32 %s221, 1
    %s223 = scalar_select %p220, %s221, %s222
    %p226 = pneg %p220
    %p227 = scmp.eq.s32.totalorder %s17, 3
    %p228 = por %p226, %p227
    %p229 = scmp.ne.s32.totalorder %s221, %s224
    %p230 = scmp.eq.s32.totalorder %s17, 0
    %p231 = por %p229, %p230
    %p232 = scmp.ne.s32.totalorder %s221, %s224
    %p233 = scmp.eq.s32.totalorder %s22, 3
    %p234 = por %p232, %p233
    %p235 = scmp.ne.s32.totalorder %s224, %s225
    %p236 = scmp.eq.s32.totalorder %s22, 0
    %p237 = por %p235, %p236
    %p238 = scmp.ne.s32.totalorder %s224, %s225
    %p239 = scmp.eq.s32.totalorder %s23, 3
    %p240 = por %p238, %p239
    %p242 = scmp.ne.s32.totalorder %s225, %s241
    %p243 = scmp.eq.s32.totalorder %s23, 0
    %p244 = por %p242, %p243
    %p245 = scmp.le.s32.totalorder 1, %s17
    %p246 = scmp.lt.s32.totalorder %s17, 5
    %p247 = pnand %p245, %p246
    %p248 = pneg %p247
    // Predicated region
    $region9: #{binary_classification_forward.1} parent=5 // pred_check
      _
    $region10: #{binary_classification_forward.1} parent=5 // pred_check_branch
      %250 = sbr.rel (%p247) target = $region12
    $region11: #{binary_classification_forward.1} parent=5 // pred_region
      %s251 = ssub.s32 %s17, 1
      // Predicated region
      $region13: #{binary_classification_forward.1} parent=11 // pred_check
        %p252 = pneg %p64
      $region14: #{binary_classification_forward.1} parent=11 // pred_check_branch
        %254 = sbr.rel (%p252) target = $region16
      $region15: #{binary_classification_forward.1} parent=11 // pred_region
        _
      $region16: #{binary_classification_forward.1} parent=11 // pred_fallthru
        _
      // Predicated region
      $region17: #{binary_classification_forward.1} parent=11 // pred_check
        %p255 = pneg %p85
      $region18: #{binary_classification_forward.1} parent=11 // pred_check_branch
        %257 = sbr.rel (%p255) target = $region20
      $region19: #{binary_classification_forward.1} parent=11 // pred_region
        _
      $region20: #{binary_classification_forward.1} parent=11 // pred_fallthru
        _
      // Predicated region
      $region21: #{binary_classification_forward.1} parent=11 // pred_check
        %p258 = pneg %p106
      $region22: #{binary_classification_forward.1} parent=11 // pred_check_branch
        %260 = sbr.rel (%p258) target = $region24
      $region23: #{binary_classification_forward.1} parent=11 // pred_region
        _
      $region24: #{binary_classification_forward.1} parent=11 // pred_fallthru
        _
      // Predicated region
      $region25: #{binary_classification_forward.1} parent=11 // pred_check
        %p261 = pneg %p127
      $region26: #{binary_classification_forward.1} parent=11 // pred_check_branch
        %263 = sbr.rel (%p261) target = $region28
      $region27: #{binary_classification_forward.1} parent=11 // pred_region
        _
      $region28: #{binary_classification_forward.1} parent=11 // pred_fallthru
        _
      // Predicated region
      $region29: #{binary_classification_forward.1} parent=11 // pred_check
        %p264 = pneg %p148
      $region30: #{binary_classification_forward.1} parent=11 // pred_check_branch
        %266 = sbr.rel (%p264) target = $region32
      $region31: #{binary_classification_forward.1} parent=11 // pred_region
        _
      $region32: #{binary_classification_forward.1} parent=11 // pred_fallthru
        _
      // Predicated region
      $region33: #{binary_classification_forward.1} parent=11 // pred_check
        %p267 = pneg %p169
      $region34: #{binary_classification_forward.1} parent=11 // pred_check_branch
        %269 = sbr.rel (%p267) target = $region36
      $region35: #{binary_classification_forward.1} parent=11 // pred_region
        _
      $region36: #{binary_classification_forward.1} parent=11 // pred_fallthru
        _
      // Predicated region
      $region37: #{binary_classification_forward.1} parent=11 // pred_check
        %p270 = pneg %p190
      $region38: #{binary_classification_forward.1} parent=11 // pred_check_branch
        %272 = sbr.rel (%p270) target = $region40
      $region39: #{binary_classification_forward.1} parent=11 // pred_region
        _
      $region40: #{binary_classification_forward.1} parent=11 // pred_fallthru
        _
      // Predicated region
      $region41: #{binary_classification_forward.1} parent=11 // pred_check
        %p273 = pneg %p211
      $region42: #{binary_classification_forward.1} parent=11 // pred_check_branch
        %275 = sbr.rel (%p273) target = $region44
      $region43: #{binary_classification_forward.1} parent=11 // pred_region
        _
      $region44: #{binary_classification_forward.1} parent=11 // pred_fallthru
        _
    $region12: #{binary_classification_forward.1} parent=5 // pred_fallthru
      _
    %p276 = scmp.lt.s32.totalorder %s17, 4
    // Predicated region
    $region45: #{binary_classification_forward.1} parent=5 // pred_check
      %p277 = pneg %p276
    $region46: #{binary_classification_forward.1} parent=5 // pred_check_branch
      %279 = sbr.rel (%p277) target = $region48
    $region47: #{binary_classification_forward.1} parent=5 // pred_region
      // Predicated region
      $region49: #{binary_classification_forward.1} parent=47 // pred_check
        %p280 = pneg %p37
      $region50: #{binary_classification_forward.1} parent=47 // pred_check_branch
        %282 = sbr.rel (%p280) target = $region52
      $region51: #{binary_classification_forward.1} parent=47 // pred_region
        %s283 = smul.u32 16, %s17
        %p284 = scmp.lt.s32.totalorder %s283, 63
        %s285 = scalar_select %p284, %s283, 63
        %s286 = smul.addr %s285, 3
        %s287 = smul.addr %s286, 8
        %s288 = scalar_lea.vmem %s0, %s287
        %s289 = smul.u32 16, %s17
      $region52: #{binary_classification_forward.1} parent=47 // pred_fallthru
        _
    $region48: #{binary_classification_forward.1} parent=5 // pred_fallthru
      _
    %p290 = scmp.le.s32.totalorder 1, %s17
    %p291 = scmp.lt.s32.totalorder %s17, 5
    %p292 = pnand %p290, %p291
    %p293 = pneg %p292
    // Predicated region
    $region53: #{binary_classification_forward.1} parent=5 // pred_check
      _
    $region54: #{binary_classification_forward.1} parent=5 // pred_check_branch
      %295 = sbr.rel (%p292) target = $region56
    $region55: #{binary_classification_forward.1} parent=5 // pred_region
      %s296 = ssub.s32 %s17, 1
      %s297 = smul.u32 16, %s22
      %p298 = scmp.lt.s32.totalorder %s297, 63
      %s299 = scalar_select %p298, %s297, 63
      %s300 = smul.addr %s299, 3
      %s301 = smul.addr %s300, 8
      %s302 = scalar_lea.vmem %s0, %s301
      %p303 = pneg %p43
      %p304 = pneg %p40
      %p305 = pneg %p64
      %p306 = pneg %p61
      %p307 = pneg %p85
      %p308 = pneg %p82
      %p309 = pneg %p106
      %p310 = pneg %p103
      %p311 = pneg %p127
      %p312 = pneg %p124
      %p313 = pneg %p148
      %p314 = pneg %p145
      %p315 = pneg %p169
      %p316 = pneg %p166
      %p317 = pneg %p190
      %p318 = pneg %p187
      %p319 = pneg %p211
      %p320 = pneg %p208
      %p321 = pneg %p237
      %p322 = pneg %p234
      %s323 = smul.u32 16, %s22
      %p324 = scmp.lt.s32.totalorder %s323, 63
      %s325 = scalar_select %p324, %s323, 63
      %s326 = smul.addr %s325, 8
      %s327 = scalar_lea.vmem %s9, %s326
      %s328 = smul.u32 16, %s22
      %p329 = scmp.lt.s32.totalorder %s328, 63
      %s330 = scalar_select %p329, %s328, 63
      %s331 = smul.addr %s330, 3
      %s332 = smul.addr %s331, 8
      %s333 = scalar_lea.vmem %s0, %s332
      %s334 = smul.u32 16, %s22
      %s335 = smul.u32 16, %s22
      %p336 = scmp.lt.s32.totalorder %s335, 63
      %s337 = scalar_select %p336, %s335, 63
      %s338 = smul.addr %s337, 8
      %s339 = scalar_lea.vmem %s9, %s338
      %s340 = smul.u32 16, %s22
      %v342 = vld [vmem:[%s333] sm:$0xff]
      %v343 = vld [vmem:[%s333 + $0x8] sm:$0xff]
      %v344 = vld [vmem:[%s333 + $0x10] sm:$0xff]
      %v345 = vld [vmem:[%s333 + $0x18] sm:$0xff]
      %v346 = vld [vmem:[%s333 + $0x20] sm:$0xff]
      %v347 = vld [vmem:[%s333 + $0x28] sm:$0xff]
      %v348 = vld [vmem:[%s333 + $0x30] sm:$0xff]
      %v349 = vld [vmem:[%s333 + $0x38] sm:$0xff]
      %v350 = vld [vmem:[%s333 + $0x40] sm:$0xff]
      %v351 = vld [vmem:[%s333 + $0x48] sm:$0xff]
      %v352 = vld [vmem:[%s333 + $0x50] sm:$0xff]
      %v353 = vld [vmem:[%s333 + $0x58] sm:$0xff]
      %v354 = vld [vmem:[%s333 + $0x60] sm:$0xff]
      %v355 = vld [vmem:[%s333 + $0x68] sm:$0xff]
      %v356 = vld [vmem:[%s333 + $0x70] sm:$0xff]
      %v357 = vld [vmem:[%s333 + $0x78] sm:$0xff]
      %v358 = vld [vmem:[%s333 + $0x80] sm:$0xff]
      %v359 = vld [vmem:[%s333 + $0x88] sm:$0xff]
      %v360 = vld [vmem:[%s333 + $0x90] sm:$0xff]
      %v361 = vld [vmem:[%s333 + $0x98] sm:$0xff]
      %v362 = vld [vmem:[%s333 + $0xa0] sm:$0xff]
      %v363 = vld [vmem:[%s333 + $0xa8] sm:$0xff]
      %v364 = vld [vmem:[%s333 + $0xb0] sm:$0xff]
      %v365 = vld [vmem:[%s333 + $0xb8] sm:$0xff]
      %v366 = vld [vmem:[%s333 + $0xc0] sm:$0xff]
      %v367 = vld [vmem:[%s333 + $0xc8] sm:$0xff]
      %v368 = vld [vmem:[%s333 + $0xd0] sm:$0xff]
      %v369 = vld [vmem:[%s333 + $0xd8] sm:$0xff]
      %v370 = vld [vmem:[%s333 + $0xe0] sm:$0xff]
      %v371 = vld [vmem:[%s333 + $0xe8] sm:$0xff]
      %v372 = vld [vmem:[%s333 + $0xf0] sm:$0xff]
      %v373 = vld [vmem:[%s333 + $0xf8] sm:$0xff]
      %v374 = vld [vmem:[%s333 + $0x100] sm:$0xff]
      %v375 = vld [vmem:[%s333 + $0x108] sm:$0xff]
      %v376 = vld [vmem:[%s333 + $0x110] sm:$0xff]
      %v377 = vld [vmem:[%s333 + $0x118] sm:$0xff]
      %v378 = vld [vmem:[%s333 + $0x120] sm:$0xff]
      %v379 = vld [vmem:[%s333 + $0x128] sm:$0xff]
      %v380 = vld [vmem:[%s333 + $0x130] sm:$0xff]
      %v381 = vld [vmem:[%s333 + $0x138] sm:$0xff]
      %v382 = vld [vmem:[%s333 + $0x140] sm:$0xff]
      %v383 = vld [vmem:[%s333 + $0x148] sm:$0xff]
      %v384 = vld [vmem:[%s333 + $0x150] sm:$0xff]
      %v385 = vld [vmem:[%s333 + $0x158] sm:$0xff]
      %v386 = vld [vmem:[%s333 + $0x160] sm:$0xff]
      %v387 = vld [vmem:[%s333 + $0x168] sm:$0xff]
      %v388 = vld [vmem:[%s333 + $0x170] sm:$0xff]
      %v389 = vld [vmem:[%s333 + $0x178] sm:$0xff]
      %v390 = vpack.c.bf16 %v345, %v342
      %v391 = vpack.c.bf16 %v346, %v343
      %v392 = vpack.c.bf16 %v347, %v344
      %v393 = vpack.c.bf16 %v351, %v348
      %v394 = vpack.c.bf16 %v352, %v349
      %v395 = vpack.c.bf16 %v353, %v350
      %v396 = vpack.c.bf16 %v357, %v354
      %v397 = vpack.c.bf16 %v358, %v355
      %v398 = vpack.c.bf16 %v359, %v356
      %v399 = vpack.c.bf16 %v363, %v360
      %v400 = vpack.c.bf16 %v364, %v361
      %v401 = vpack.c.bf16 %v365, %v362
      %v402 = vpack.c.bf16 %v369, %v366
      %v403 = vpack.c.bf16 %v370, %v367
      %v404 = vpack.c.bf16 %v371, %v368
      %v405 = vpack.c.bf16 %v375, %v372
      %v406 = vpack.c.bf16 %v376, %v373
      %v407 = vpack.c.bf16 %v377, %v374
      %v408 = vpack.c.bf16 %v381, %v378
      %v409 = vpack.c.bf16 %v382, %v379
      %v410 = vpack.c.bf16 %v383, %v380
      %v411 = vpack.c.bf16 %v387, %v384
      %v412 = vpack.c.bf16 %v388, %v385
      %v413 = vpack.c.bf16 %v389, %v386
      %v414 = vld [vmem:[%s1] sm:$0xf]
      %v415 = vld [vmem:[%s1 + $0x4] sm:$0xf]
      %v416 = vld [vmem:[%s1 + $0x8] sm:$0xf]
      %v417 = vld [vmem:[%s1 + $0xc] sm:$0xf]
      %v418 = vld [vmem:[%s1 + $0x10] sm:$0xf]
      %v419 = vld [vmem:[%s1 + $0x14] sm:$0xf]
      %v420 = vld [vmem:[%s1 + $0x18] sm:$0xf]
      %v421 = vld [vmem:[%s1 + $0x1c] sm:$0xf]
      %v422 = vld [vmem:[%s1 + $0x20] sm:$0xf]
      %v423 = vld [vmem:[%s1 + $0x24] sm:$0xf]
      %v424 = vld [vmem:[%s1 + $0x28] sm:$0xf]
      %v425 = vld [vmem:[%s1 + $0x2c] sm:$0xf]
      %v426 = vld [vmem:[%s1 + $0x30] sm:$0xf]
      %v427 = vld [vmem:[%s1 + $0x34] sm:$0xf]
      %v428 = vld [vmem:[%s1 + $0x38] sm:$0xf]
      %v429 = vld [vmem:[%s1 + $0x3c] sm:$0xf]
      %v430 = vld [vmem:[%s1 + $0x40] sm:$0xf]
      %v431 = vld [vmem:[%s1 + $0x44] sm:$0xf]
      %v432 = vld [vmem:[%s1 + $0x48] sm:$0xf]
      %v433 = vld [vmem:[%s1 + $0x4c] sm:$0xf]
      %v434 = vld [vmem:[%s1 + $0x50] sm:$0xf]
      %v435 = vld [vmem:[%s1 + $0x54] sm:$0xf]
      %v436 = vld [vmem:[%s1 + $0x58] sm:$0xf]
      %v437 = vld [vmem:[%s1 + $0x5c] sm:$0xf]
      %v438 = vld [vmem:[%s1 + $0x60] sm:$0xf]
      %v439 = vld [vmem:[%s1 + $0x64] sm:$0xf]
      %v440 = vld [vmem:[%s1 + $0x68] sm:$0xf]
      %v441 = vld [vmem:[%s1 + $0x6c] sm:$0xf]
      %v442 = vld [vmem:[%s1 + $0x70] sm:$0xf]
      %v443 = vld [vmem:[%s1 + $0x74] sm:$0xf]
      %v444 = vld [vmem:[%s1 + $0x78] sm:$0xf]
      %v445 = vld [vmem:[%s1 + $0x7c] sm:$0xf]
      %v446 = vld [vmem:[%s1 + $0x80] sm:$0xf]
      %v447 = vld [vmem:[%s1 + $0x84] sm:$0xf]
      %v448 = vld [vmem:[%s1 + $0x88] sm:$0xf]
      %v449 = vld [vmem:[%s1 + $0x8c] sm:$0xf]
      %v450 = vld [vmem:[%s1 + $0x90] sm:$0xf]
      %v451 = vld [vmem:[%s1 + $0x94] sm:$0x3]
      %v452 = vld [vmem:[%s2] sm:$0x1]
      %v454 = vperm.slane %v452, 0
      %v494 = vunpack.c.l.b16 %v414
      %v495 = vunpack.c.l.b16 %v415
      %v496 = vunpack.c.l.b16 %v416
      %v497 = vunpack.c.l.b16 %v417
      %v498 = vunpack.c.l.b16 %v418
      %v499 = vunpack.c.l.b16 %v419
      %v500 = vunpack.c.l.b16 %v420
      %v501 = vunpack.c.l.b16 %v421
      %v502 = vunpack.c.l.b16 %v422
      %v503 = vunpack.c.l.b16 %v423
      %v504 = vunpack.c.l.b16 %v424
      %v505 = vunpack.c.l.b16 %v425
      %v506 = vunpack.c.l.b16 %v426
      %v507 = vunpack.c.l.b16 %v427
      %v508 = vunpack.c.l.b16 %v428
      %v509 = vunpack.c.l.b16 %v429
      %v510 = vunpack.c.l.b16 %v430
      %v511 = vunpack.c.l.b16 %v431
      %v512 = vunpack.c.l.b16 %v432
      %v513 = vunpack.c.l.b16 %v433
      %v514 = vunpack.c.l.b16 %v434
      %v515 = vunpack.c.l.b16 %v435
      %v516 = vunpack.c.l.b16 %v436
      %v517 = vunpack.c.l.b16 %v437
      %v518 = vunpack.c.l.b16 %v438
      %v519 = vunpack.c.l.b16 %v439
      %v520 = vunpack.c.l.b16 %v440
      %v521 = vunpack.c.l.b16 %v441
      %v522 = vunpack.c.l.b16 %v442
      %v523 = vunpack.c.l.b16 %v443
      %v524 = vunpack.c.l.b16 %v444
      %v525 = vunpack.c.l.b16 %v445
      %v526 = vunpack.c.l.b16 %v446
      %v527 = vunpack.c.l.b16 %v447
      %v528 = vunpack.c.l.b16 %v448
      %v529 = vunpack.c.l.b16 %v449
      %v530 = vunpack.c.l.b16 %v450
      %v531 = vunpack.c.l.b16 %v451
      %v532 = vpack.c.b16 %v495, %v494
      %v533 = vpack.c.b16 %v497, %v496
      %v534 = vpack.c.b16 %v499, %v498
      %v535 = vpack.c.b16 %v501, %v500
      %v536 = vpack.c.b16 %v503, %v502
      %v537 = vpack.c.b16 %v505, %v504
      %v538 = vpack.c.b16 %v507, %v506
      %v539 = vpack.c.b16 %v509, %v508
      %v540 = vpack.c.b16 %v511, %v510
      %v541 = vpack.c.b16 %v513, %v512
      %v542 = vpack.c.b16 %v515, %v514
      %v543 = vpack.c.b16 %v517, %v516
      %v544 = vpack.c.b16 %v519, %v518
      %v545 = vpack.c.b16 %v521, %v520
      %v546 = vpack.c.b16 %v523, %v522
      %v547 = vpack.c.b16 %v525, %v524
      %v548 = vpack.c.b16 %v527, %v526
      %v549 = vpack.c.b16 %v529, %v528
      %v550 = vpack.c.b16 %v531, %v530
      %vm569 = vcmask 359424
      %v571 = vsel %vm569, %v392, 0
      %v574 = vsel %vm569, %v395, 0
      %v577 = vsel %vm569, %v398, 0
      %v580 = vsel %vm569, %v401, 0
      %v583 = vsel %vm569, %v404, 0
      %v586 = vsel %vm569, %v407, 0
      %v589 = vsel %vm569, %v410, 0
      %v592 = vsel %vm569, %v413, 0
      %vm594 = vcmask 1045504
      %v596 = vsel %vm594, %v550, 0
      %598 = vmatpush.bf16.msra.mxu0 %v539
      %599 = vmatpush.bf16.msra.mxu0 %v538
      %600 = vmatpush.bf16.msra.mxu0 %v537
      %601 = vmatpush.bf16.msra.mxu0 %v536
      %602 = vmatpush.bf16.msra.mxu0 %v535
      %603 = vmatpush.bf16.msra.mxu0 %v534
      %604 = vmatpush.bf16.msra.mxu0 %v533
      %605 = vmatpush.bf16.msra.mxu0 %v532
      %606 = vmatmul.bf16.gmra.mxu0 %v390
      %v607 = vpop.f32.mrf.mxu0
      %v608 = vadd.f32 %v454, %v607
      %v609 = vpop.f32.mrf.mxu0
      %v610 = vadd.f32 %v454, %v609
      %611 = vmatmul.bf16.gmra.mxu0 %v393
      %v612 = vpop.f32.mrf.mxu0
      %v613 = vadd.f32 %v454, %v612
      %v614 = vpop.f32.mrf.mxu0
      %v615 = vadd.f32 %v454, %v614
      %616 = vmatmul.bf16.gmra.mxu0 %v396
      %v617 = vpop.f32.mrf.mxu0
      %v618 = vadd.f32 %v454, %v617
      %v619 = vpop.f32.mrf.mxu0
      %v620 = vadd.f32 %v454, %v619
      %621 = vmatmul.bf16.gmra.mxu0 %v399
      %v622 = vpop.f32.mrf.mxu0
      %v623 = vadd.f32 %v454, %v622
      %v624 = vpop.f32.mrf.mxu0
      %v625 = vadd.f32 %v454, %v624
      %626 = vmatmul.bf16.gmra.mxu0 %v402
      %v627 = vpop.f32.mrf.mxu0
      %v628 = vadd.f32 %v454, %v627
      %v629 = vpop.f32.mrf.mxu0
      %v630 = vadd.f32 %v454, %v629
      %631 = vmatmul.bf16.gmra.mxu0 %v405
      %v632 = vpop.f32.mrf.mxu0
      %v633 = vadd.f32 %v454, %v632
      %v634 = vpop.f32.mrf.mxu0
      %v635 = vadd.f32 %v454, %v634
      %636 = vmatmul.bf16.gmra.mxu0 %v408
      %v637 = vpop.f32.mrf.mxu0
      %v638 = vadd.f32 %v454, %v637
      %v639 = vpop.f32.mrf.mxu0
      %v640 = vadd.f32 %v454, %v639
      %641 = vmatmul.bf16.gmra.mxu0 %v411
      %v642 = vpop.f32.mrf.mxu0
      %v643 = vadd.f32 %v454, %v642
      %v644 = vpop.f32.mrf.mxu0
      %v645 = vadd.f32 %v454, %v644
      %646 = vdwg.mxu0
      %647 = vmatpush.bf16.msra.mxu0 %v547
      %648 = vmatpush.bf16.msra.mxu0 %v546
      %649 = vmatpush.bf16.msra.mxu0 %v545
      %650 = vmatpush.bf16.msra.mxu0 %v544
      %651 = vmatpush.bf16.msra.mxu0 %v543
      %652 = vmatpush.bf16.msra.mxu0 %v542
      %653 = vmatpush.bf16.msra.mxu0 %v541
      %654 = vmatpush.bf16.msra.mxu0 %v540
      %655 = vmatmul.bf16.gmra.mxu0 %v391
      %v656 = vpop.f32.mrf.mxu0
      %v657 = vadd.f32 %v608, %v656
      %v658 = vpop.f32.mrf.mxu0
      %v659 = vadd.f32 %v610, %v658
      %660 = vmatmul.bf16.gmra.mxu0 %v394
      %v661 = vpop.f32.mrf.mxu0
      %v662 = vadd.f32 %v613, %v661
      %v663 = vpop.f32.mrf.mxu0
      %v664 = vadd.f32 %v615, %v663
      %665 = vmatmul.bf16.gmra.mxu0 %v397
      %v666 = vpop.f32.mrf.mxu0
      %v667 = vadd.f32 %v618, %v666
      %v668 = vpop.f32.mrf.mxu0
      %v669 = vadd.f32 %v620, %v668
      %670 = vmatmul.bf16.gmra.mxu0 %v400
      %v671 = vpop.f32.mrf.mxu0
      %v672 = vadd.f32 %v623, %v671
      %v673 = vpop.f32.mrf.mxu0
      %v674 = vadd.f32 %v625, %v673
      %675 = vmatmul.bf16.gmra.mxu0 %v403
      %v676 = vpop.f32.mrf.mxu0
      %v677 = vadd.f32 %v628, %v676
      %v678 = vpop.f32.mrf.mxu0
      %v679 = vadd.f32 %v630, %v678
      %680 = vmatmul.bf16.gmra.mxu0 %v406
      %v681 = vpop.f32.mrf.mxu0
      %v682 = vadd.f32 %v633, %v681
      %v683 = vpop.f32.mrf.mxu0
      %v684 = vadd.f32 %v635, %v683
      %685 = vmatmul.bf16.gmra.mxu0 %v409
      %v686 = vpop.f32.mrf.mxu0
      %v687 = vadd.f32 %v638, %v686
      %v688 = vpop.f32.mrf.mxu0
      %v689 = vadd.f32 %v640, %v688
      %690 = vmatmul.bf16.gmra.mxu0 %v412
      %v691 = vpop.f32.mrf.mxu0
      %v692 = vadd.f32 %v643, %v691
      %v693 = vpop.f32.mrf.mxu0
      %v694 = vadd.f32 %v645, %v693
      %695 = vdwg.mxu0
      %696 = vmatpush.bf16.msra.mxu0 0
      %697 = vmatpush.bf16.msra.mxu0 0
      %698 = vmatpush.bf16.msra.mxu0 0
      %699 = vmatpush.bf16.msra.mxu0 0
      %700 = vmatpush.bf16.msra.mxu0 0
      %701 = vmatpush.bf16.msra.mxu0 %v596
      %702 = vmatpush.bf16.msra.mxu0 %v549
      %703 = vmatpush.bf16.msra.mxu0 %v548
      %704 = vmatmul.bf16.gmra.mxu0 %v571
      %v705 = vpop.f32.mrf.mxu0
      %v706 = vadd.f32 %v657, %v705
      %v707 = vpop.f32.mrf.mxu0
      %v708 = vadd.f32 %v659, %v707
      %709 = vmatmul.bf16.gmra.mxu0 %v574
      %v710 = vpop.f32.mrf.mxu0
      %v711 = vadd.f32 %v662, %v710
      %v712 = vpop.f32.mrf.mxu0
      %v713 = vadd.f32 %v664, %v712
      %714 = vmatmul.bf16.gmra.mxu0 %v577
      %v715 = vpop.f32.mrf.mxu0
      %v716 = vadd.f32 %v667, %v715
      %v717 = vpop.f32.mrf.mxu0
      %v718 = vadd.f32 %v669, %v717
      %719 = vmatmul.bf16.gmra.mxu0 %v580
      %v720 = vpop.f32.mrf.mxu0
      %v721 = vadd.f32 %v672, %v720
      %v722 = vpop.f32.mrf.mxu0
      %v723 = vadd.f32 %v674, %v722
      %724 = vmatmul.bf16.gmra.mxu0 %v583
      %v725 = vpop.f32.mrf.mxu0
      %v726 = vadd.f32 %v677, %v725
      %v727 = vpop.f32.mrf.mxu0
      %v728 = vadd.f32 %v679, %v727
      %729 = vmatmul.bf16.gmra.mxu0 %v586
      %v730 = vpop.f32.mrf.mxu0
      %v731 = vadd.f32 %v682, %v730
      %v732 = vpop.f32.mrf.mxu0
      %v733 = vadd.f32 %v684, %v732
      %734 = vmatmul.bf16.gmra.mxu0 %v589
      %v735 = vpop.f32.mrf.mxu0
      %v736 = vadd.f32 %v687, %v735
      %v737 = vpop.f32.mrf.mxu0
      %v738 = vadd.f32 %v689, %v737
      %739 = vmatmul.bf16.gmra.mxu0 %v592
      %v740 = vpop.f32.mrf.mxu0
      %v741 = vadd.f32 %v692, %v740
      %v742 = vpop.f32.mrf.mxu0
      %v743 = vadd.f32 %v694, %v742
      %744 = vdwg.mxu0
      %v745 = vmax.f32 %v706, 0.0
      %v746 = vmax.f32 %v708, 0.0
      %v747 = vmax.f32 %v711, 0.0
      %v748 = vmax.f32 %v713, 0.0
      %v749 = vmax.f32 %v716, 0.0
      %v750 = vmax.f32 %v718, 0.0
      %v751 = vmax.f32 %v721, 0.0
      %v752 = vmax.f32 %v723, 0.0
      %v753 = vmax.f32 %v726, 0.0
      %v754 = vmax.f32 %v728, 0.0
      %v755 = vmax.f32 %v731, 0.0
      %v756 = vmax.f32 %v733, 0.0
      %v757 = vmax.f32 %v736, 0.0
      %v758 = vmax.f32 %v738, 0.0
      %v759 = vmax.f32 %v741, 0.0
      %v760 = vmax.f32 %v743, 0.0
      %v761 = vpack.c.bf16 %v746, %v745
      %v762 = vpack.c.bf16 %v748, %v747
      %v763 = vpack.c.bf16 %v750, %v749
      %v764 = vpack.c.bf16 %v752, %v751
      %v765 = vpack.c.bf16 %v754, %v753
      %v766 = vpack.c.bf16 %v756, %v755
      %v767 = vpack.c.bf16 %v758, %v757
      %v768 = vpack.c.bf16 %v760, %v759
      %v769 = vld [vmem:[%s3] sm:$0xf]
      %v770 = vld [vmem:[%s3 + $0x4] sm:$0xf]
      %v771 = vld [vmem:[%s3 + $0x8] sm:$0xf]
      %v772 = vld [vmem:[%s3 + $0xc] sm:$0xf]
      %v773 = vld [vmem:[%s3 + $0x10] sm:$0xf]
      %v774 = vld [vmem:[%s3 + $0x14] sm:$0xf]
      %v775 = vld [vmem:[%s3 + $0x18] sm:$0xf]
      %v776 = vld [vmem:[%s3 + $0x1c] sm:$0xf]
      %v777 = vld [vmem:[%s3 + $0x20] sm:$0xf]
      %v778 = vld [vmem:[%s3 + $0x24] sm:$0xf]
      %v779 = vld [vmem:[%s3 + $0x28] sm:$0xf]
      %v780 = vld [vmem:[%s3 + $0x2c] sm:$0xf]
      %v781 = vld [vmem:[%s3 + $0x30] sm:$0xf]
      %v782 = vld [vmem:[%s3 + $0x34] sm:$0xf]
      %v783 = vld [vmem:[%s3 + $0x38] sm:$0xf]
      %v784 = vld [vmem:[%s3 + $0x3c] sm:$0xf]
      %v785 = vld [vmem:[%s4] sm:$0x1]
      %v787 = vperm.slane %v785, 0
      %v805 = vunpack.c.l.b16 %v769
      %v806 = vunpack.c.l.b16 %v770
      %v807 = vunpack.c.l.b16 %v771
      %v808 = vunpack.c.l.b16 %v772
      %v809 = vunpack.c.l.b16 %v773
      %v810 = vunpack.c.l.b16 %v774
      %v811 = vunpack.c.l.b16 %v775
      %v812 = vunpack.c.l.b16 %v776
      %v813 = vunpack.c.l.b16 %v777
      %v814 = vunpack.c.l.b16 %v778
      %v815 = vunpack.c.l.b16 %v779
      %v816 = vunpack.c.l.b16 %v780
      %v817 = vunpack.c.l.b16 %v781
      %v818 = vunpack.c.l.b16 %v782
      %v819 = vunpack.c.l.b16 %v783
      %v820 = vunpack.c.l.b16 %v784
      %v821 = vpack.c.b16 %v806, %v805
      %v822 = vpack.c.b16 %v808, %v807
      %v823 = vpack.c.b16 %v810, %v809
      %v824 = vpack.c.b16 %v812, %v811
      %v825 = vpack.c.b16 %v814, %v813
      %v826 = vpack.c.b16 %v816, %v815
      %v827 = vpack.c.b16 %v818, %v817
      %v828 = vpack.c.b16 %v820, %v819
      %837 = vmatpush.bf16.msra.mxu0 %v828
      %838 = vmatpush.bf16.msra.mxu0 %v827
      %839 = vmatpush.bf16.msra.mxu0 %v826
      %840 = vmatpush.bf16.msra.mxu0 %v825
      %841 = vmatpush.bf16.msra.mxu0 %v824
      %842 = vmatpush.bf16.msra.mxu0 %v823
      %843 = vmatpush.bf16.msra.mxu0 %v822
      %844 = vmatpush.bf16.msra.mxu0 %v821
      %845 = vmatmul.bf16.gmra.mxu0 %v761
      %v846 = vpop.f32.mrf.mxu0
      %v847 = vadd.f32 %v787, %v846
      %v848 = vpop.f32.mrf.mxu0
      %v849 = vadd.f32 %v787, %v848
      %850 = vmatmul.bf16.gmra.mxu0 %v762
      %v851 = vpop.f32.mrf.mxu0
      %v852 = vadd.f32 %v787, %v851
      %v853 = vpop.f32.mrf.mxu0
      %v854 = vadd.f32 %v787, %v853
      %855 = vmatmul.bf16.gmra.mxu0 %v763
      %v856 = vpop.f32.mrf.mxu0
      %v857 = vadd.f32 %v787, %v856
      %v858 = vpop.f32.mrf.mxu0
      %v859 = vadd.f32 %v787, %v858
      %860 = vmatmul.bf16.gmra.mxu0 %v764
      %v861 = vpop.f32.mrf.mxu0
      %v862 = vadd.f32 %v787, %v861
      %v863 = vpop.f32.mrf.mxu0
      %v864 = vadd.f32 %v787, %v863
      %865 = vmatmul.bf16.gmra.mxu0 %v765
      %v866 = vpop.f32.mrf.mxu0
      %v867 = vadd.f32 %v787, %v866
      %v868 = vpop.f32.mrf.mxu0
      %v869 = vadd.f32 %v787, %v868
      %870 = vmatmul.bf16.gmra.mxu0 %v766
      %v871 = vpop.f32.mrf.mxu0
      %v872 = vadd.f32 %v787, %v871
      %v873 = vpop.f32.mrf.mxu0
      %v874 = vadd.f32 %v787, %v873
      %875 = vmatmul.bf16.gmra.mxu0 %v767
      %v876 = vpop.f32.mrf.mxu0
      %v877 = vadd.f32 %v787, %v876
      %v878 = vpop.f32.mrf.mxu0
      %v879 = vadd.f32 %v787, %v878
      %880 = vmatmul.bf16.gmra.mxu0 %v768
      %v881 = vpop.f32.mrf.mxu0
      %v882 = vadd.f32 %v787, %v881
      %v883 = vpop.f32.mrf.mxu0
      %v884 = vadd.f32 %v787, %v883
      %885 = vdwg.mxu0
      %v886 = vmax.f32 %v847, 0.0
      %v887 = vmax.f32 %v849, 0.0
      %v888 = vmax.f32 %v852, 0.0
      %v889 = vmax.f32 %v854, 0.0
      %v890 = vmax.f32 %v857, 0.0
      %v891 = vmax.f32 %v859, 0.0
      %v892 = vmax.f32 %v862, 0.0
      %v893 = vmax.f32 %v864, 0.0
      %v894 = vmax.f32 %v867, 0.0
      %v895 = vmax.f32 %v869, 0.0
      %v896 = vmax.f32 %v872, 0.0
      %v897 = vmax.f32 %v874, 0.0
      %v898 = vmax.f32 %v877, 0.0
      %v899 = vmax.f32 %v879, 0.0
      %v900 = vmax.f32 %v882, 0.0
      %v901 = vmax.f32 %v884, 0.0
      %v902 = vpack.c.bf16 %v887, %v886
      %v903 = vpack.c.bf16 %v889, %v888
      %v904 = vpack.c.bf16 %v891, %v890
      %v905 = vpack.c.bf16 %v893, %v892
      %v906 = vpack.c.bf16 %v895, %v894
      %v907 = vpack.c.bf16 %v897, %v896
      %v908 = vpack.c.bf16 %v899, %v898
      %v909 = vpack.c.bf16 %v901, %v900
      %v910 = vld [vmem:[%s5] sm:$0xf]
      %v911 = vld [vmem:[%s5 + $0x4] sm:$0xf]
      %v912 = vld [vmem:[%s5 + $0x8] sm:$0xf]
      %v913 = vld [vmem:[%s5 + $0xc] sm:$0xf]
      %v914 = vld [vmem:[%s5 + $0x10] sm:$0xf]
      %v915 = vld [vmem:[%s5 + $0x14] sm:$0xf]
      %v916 = vld [vmem:[%s5 + $0x18] sm:$0xf]
      %v917 = vld [vmem:[%s5 + $0x1c] sm:$0xf]
      %v918 = vld [vmem:[%s6] sm:$0x1]
      %v920 = vperm.slane %v918, 0
      %v930 = vunpack.c.l.b16 %v910
      %v931 = vunpack.c.l.b16 %v911
      %v932 = vunpack.c.l.b16 %v912
      %v933 = vunpack.c.l.b16 %v913
      %v934 = vunpack.c.l.b16 %v914
      %v935 = vunpack.c.l.b16 %v915
      %v936 = vunpack.c.l.b16 %v916
      %v937 = vunpack.c.l.b16 %v917
      %v938 = vpack.c.b16 %v931, %v930
      %v939 = vpack.c.b16 %v933, %v932
      %v940 = vpack.c.b16 %v935, %v934
      %v941 = vpack.c.b16 %v937, %v936
      %vm946 = vcmask 523264
      %v948 = vsel %vm946, %v902, 0
      %v951 = vsel %vm946, %v903, 0
      %v954 = vsel %vm946, %v904, 0
      %v957 = vsel %vm946, %v905, 0
      %v960 = vsel %vm946, %v906, 0
      %v963 = vsel %vm946, %v907, 0
      %v966 = vsel %vm946, %v908, 0
      %v969 = vsel %vm946, %v909, 0
      %971 = vmatpush.bf16.msra.mxu0 0
      %972 = vmatpush.bf16.msra.mxu0 0
      %973 = vmatpush.bf16.msra.mxu0 0
      %974 = vmatpush.bf16.msra.mxu0 0
      %975 = vmatpush.bf16.msra.mxu0 %v941
      %976 = vmatpush.bf16.msra.mxu0 %v940
      %977 = vmatpush.bf16.msra.mxu0 %v939
      %978 = vmatpush.bf16.msra.mxu0 %v938
      %979 = vmatmul.bf16.gmra.mxu0 %v948
      %v980 = vpop.f32.mrf.mxu0
      %v981 = vadd.f32 %v920, %v980
      %v982 = vpop.f32.mrf.mxu0
      %v983 = vadd.f32 %v920, %v982
      %984 = vmatmul.bf16.gmra.mxu0 %v951
      %v985 = vpop.f32.mrf.mxu0
      %v986 = vadd.f32 %v920, %v985
      %v987 = vpop.f32.mrf.mxu0
      %v988 = vadd.f32 %v920, %v987
      %989 = vmatmul.bf16.gmra.mxu0 %v954
      %v990 = vpop.f32.mrf.mxu0
      %v991 = vadd.f32 %v920, %v990
      %v992 = vpop.f32.mrf.mxu0
      %v993 = vadd.f32 %v920, %v992
      %994 = vmatmul.bf16.gmra.mxu0 %v957
      %v995 = vpop.f32.mrf.mxu0
      %v996 = vadd.f32 %v920, %v995
      %v997 = vpop.f32.mrf.mxu0
      %v998 = vadd.f32 %v920, %v997
      %999 = vmatmul.bf16.gmra.mxu0 %v960
      %v1000 = vpop.f32.mrf.mxu0
      %v1001 = vadd.f32 %v920, %v1000
      %v1002 = vpop.f32.mrf.mxu0
      %v1003 = vadd.f32 %v920, %v1002
      %1004 = vmatmul.bf16.gmra.mxu0 %v963
      %v1005 = vpop.f32.mrf.mxu0
      %v1006 = vadd.f32 %v920, %v1005
      %v1007 = vpop.f32.mrf.mxu0
      %v1008 = vadd.f32 %v920, %v1007
      %1009 = vmatmul.bf16.gmra.mxu0 %v966
      %v1010 = vpop.f32.mrf.mxu0
      %v1011 = vadd.f32 %v920, %v1010
      %v1012 = vpop.f32.mrf.mxu0
      %v1013 = vadd.f32 %v920, %v1012
      %1014 = vmatmul.bf16.gmra.mxu0 %v969
      %v1015 = vpop.f32.mrf.mxu0
      %v1016 = vadd.f32 %v920, %v1015
      %v1017 = vpop.f32.mrf.mxu0
      %v1018 = vadd.f32 %v920, %v1017
      %1019 = vdwg.mxu0
      %v1020 = vmax.f32 %v981, 0.0
      %v1021 = vmax.f32 %v983, 0.0
      %v1022 = vmax.f32 %v986, 0.0
      %v1023 = vmax.f32 %v988, 0.0
      %v1024 = vmax.f32 %v991, 0.0
      %v1025 = vmax.f32 %v993, 0.0
      %v1026 = vmax.f32 %v996, 0.0
      %v1027 = vmax.f32 %v998, 0.0
      %v1028 = vmax.f32 %v1001, 0.0
      %v1029 = vmax.f32 %v1003, 0.0
      %v1030 = vmax.f32 %v1006, 0.0
      %v1031 = vmax.f32 %v1008, 0.0
      %v1032 = vmax.f32 %v1011, 0.0
      %v1033 = vmax.f32 %v1013, 0.0
      %v1034 = vmax.f32 %v1016, 0.0
      %v1035 = vmax.f32 %v1018, 0.0
      %v1036 = vld [vmem:[%s7] sm:$0x1]
      %v1037 = vunpack.c.l.bf16 %v1036
      %v1038 = vperm.slane %v1037, 0
      %v1039 = vmul.f32 %v1020, %v1038
      %v1040 = vmul.f32 %v1021, %v1038
      %v1041 = vmul.f32 %v1022, %v1038
      %v1042 = vmul.f32 %v1023, %v1038
      %v1043 = vmul.f32 %v1024, %v1038
      %v1044 = vmul.f32 %v1025, %v1038
      %v1045 = vmul.f32 %v1026, %v1038
      %v1046 = vmul.f32 %v1027, %v1038
      %v1047 = vmul.f32 %v1028, %v1038
      %v1048 = vmul.f32 %v1029, %v1038
      %v1049 = vmul.f32 %v1030, %v1038
      %v1050 = vmul.f32 %v1031, %v1038
      %v1051 = vmul.f32 %v1032, %v1038
      %v1052 = vmul.f32 %v1033, %v1038
      %v1053 = vmul.f32 %v1034, %v1038
      %v1054 = vmul.f32 %v1035, %v1038
      %vm1055 = vcmask 261120
      %v1056 = vsel %vm1055, %v1039, 0.0
      %1057 = vadd.xlane.f32.xlu0 %v1056
      %v1058 = vpop.xlane.xlu0 %1057
      %v1059 = vsel %vm1055, %v1040, 0.0
      %1060 = vadd.xlane.f32.xlu0 %v1059
      %v1061 = vpop.xlane.xlu0 %1060
      %v1062 = vsel %vm1055, %v1041, 0.0
      %1063 = vadd.xlane.f32.xlu0 %v1062
      %v1064 = vpop.xlane.xlu0 %1063
      %v1065 = vsel %vm1055, %v1042, 0.0
      %1066 = vadd.xlane.f32.xlu0 %v1065
      %v1067 = vpop.xlane.xlu0 %1066
      %v1068 = vsel %vm1055, %v1043, 0.0
      %1069 = vadd.xlane.f32.xlu0 %v1068
      %v1070 = vpop.xlane.xlu0 %1069
      %v1071 = vsel %vm1055, %v1044, 0.0
      %1072 = vadd.xlane.f32.xlu0 %v1071
      %v1073 = vpop.xlane.xlu0 %1072
      %v1074 = vsel %vm1055, %v1045, 0.0
      %1075 = vadd.xlane.f32.xlu0 %v1074
      %v1076 = vpop.xlane.xlu0 %1075
      %v1077 = vsel %vm1055, %v1046, 0.0
      %1078 = vadd.xlane.f32.xlu0 %v1077
      %v1079 = vpop.xlane.xlu0 %1078
      %v1080 = vsel %vm1055, %v1047, 0.0
      %1081 = vadd.xlane.f32.xlu0 %v1080
      %v1082 = vpop.xlane.xlu0 %1081
      %v1083 = vsel %vm1055, %v1048, 0.0
      %1084 = vadd.xlane.f32.xlu0 %v1083
      %v1085 = vpop.xlane.xlu0 %1084
      %v1086 = vsel %vm1055, %v1049, 0.0
      %1087 = vadd.xlane.f32.xlu0 %v1086
      %v1088 = vpop.xlane.xlu0 %1087
      %v1089 = vsel %vm1055, %v1050, 0.0
      %1090 = vadd.xlane.f32.xlu0 %v1089
      %v1091 = vpop.xlane.xlu0 %1090
      %v1092 = vsel %vm1055, %v1051, 0.0
      %1093 = vadd.xlane.f32.xlu0 %v1092
      %v1094 = vpop.xlane.xlu0 %1093
      %v1095 = vsel %vm1055, %v1052, 0.0
      %1096 = vadd.xlane.f32.xlu0 %v1095
      %v1097 = vpop.xlane.xlu0 %1096
      %v1098 = vsel %vm1055, %v1053, 0.0
      %1099 = vadd.xlane.f32.xlu0 %v1098
      %v1100 = vpop.xlane.xlu0 %1099
      %v1101 = vsel %vm1055, %v1054, 0.0
      %1102 = vadd.xlane.f32.xlu0 %v1101
      %v1103 = vpop.xlane.xlu0 %1102
      %v1104 = vld [vmem:[#allocation2] sm:$0x1]
      %v1106 = vperm.slane %v1104, 0
      %v1108 = vadd.f32 %v1058, %v1106
      %v1109 = vadd.f32 %v1061, %v1106
      %v1110 = vadd.f32 %v1064, %v1106
      %v1111 = vadd.f32 %v1067, %v1106
      %v1112 = vadd.f32 %v1070, %v1106
      %v1113 = vadd.f32 %v1073, %v1106
      %v1114 = vadd.f32 %v1076, %v1106
      %v1115 = vadd.f32 %v1079, %v1106
      %v1116 = vadd.f32 %v1082, %v1106
      %v1117 = vadd.f32 %v1085, %v1106
      %v1118 = vadd.f32 %v1088, %v1106
      %v1119 = vadd.f32 %v1091, %v1106
      %v1120 = vadd.f32 %v1094, %v1106
      %v1121 = vadd.f32 %v1097, %v1106
      %v1122 = vadd.f32 %v1100, %v1106
      %v1123 = vadd.f32 %v1103, %v1106
      %vm1124 = vcmask 7168
      %1125 = vst.msk [vmem:[%s339] sm:$0xff] %vm1124, %v1108
      %1126 = vst.msk [vmem:[%s339 + $0x8] sm:$0xff] %vm1124, %v1109
      %1127 = vst.msk [vmem:[%s339 + $0x10] sm:$0xff] %vm1124, %v1110
      %1128 = vst.msk [vmem:[%s339 + $0x18] sm:$0xff] %vm1124, %v1111
      %1129 = vst.msk [vmem:[%s339 + $0x20] sm:$0xff] %vm1124, %v1112
      %1130 = vst.msk [vmem:[%s339 + $0x28] sm:$0xff] %vm1124, %v1113
      %1131 = vst.msk [vmem:[%s339 + $0x30] sm:$0xff] %vm1124, %v1114
      %1132 = vst.msk [vmem:[%s339 + $0x38] sm:$0xff] %vm1124, %v1115
      %1133 = vst.msk [vmem:[%s339 + $0x40] sm:$0xff] %vm1124, %v1116
      %1134 = vst.msk [vmem:[%s339 + $0x48] sm:$0xff] %vm1124, %v1117
      %1135 = vst.msk [vmem:[%s339 + $0x50] sm:$0xff] %vm1124, %v1118
      %1136 = vst.msk [vmem:[%s339 + $0x58] sm:$0xff] %vm1124, %v1119
      %1137 = vst.msk [vmem:[%s339 + $0x60] sm:$0xff] %vm1124, %v1120
      %1138 = vst.msk [vmem:[%s339 + $0x68] sm:$0xff] %vm1124, %v1121
      %1139 = vst.msk [vmem:[%s339 + $0x70] sm:$0xff] %vm1124, %v1122
      %1140 = vst.msk [vmem:[%s339 + $0x78] sm:$0xff] %vm1124, %v1123
      %s1141 = smul.u32 16, %s22
      %p1142 = scmp.lt.s32.totalorder %s1141, 63
      %s1143 = scalar_select %p1142, %s1141, 63
      %s1144 = smul.addr %s1143, 8
      %s1145 = scalar_lea.vmem %s9, %s1144
      // Predicated region
      $region57: #{binary_classification_forward.1} parent=55 // pred_check
        %p1146 = pneg %p234
      $region58: #{binary_classification_forward.1} parent=55 // pred_check_branch
        %1148 = sbr.rel (%p1146) target = $region60
      $region59: #{binary_classification_forward.1} parent=55 // pred_region
        %s1149 = smul.u32 16, %s22
      $region60: #{binary_classification_forward.1} parent=55 // pred_fallthru
        _
    $region56: #{binary_classification_forward.1} parent=5 // pred_fallthru
      _
    %p1150 = scmp.le.s32.totalorder 2, %s17
    // Predicated region
    $region61: #{binary_classification_forward.1} parent=5 // pred_check
      %p1151 = pneg %p1150
    $region62: #{binary_classification_forward.1} parent=5 // pred_check_branch
      %1153 = sbr.rel (%p1151) target = $region64
    $region63: #{binary_classification_forward.1} parent=5 // pred_region
      %s1154 = ssub.s32 %s17, 2
      // Predicated region
      $region65: #{binary_classification_forward.1} parent=63 // pred_check
        %p1155 = pneg %p240
      $region66: #{binary_classification_forward.1} parent=63 // pred_check_branch
        %1157 = sbr.rel (%p1155) target = $region68
      $region67: #{binary_classification_forward.1} parent=63 // pred_region
        %s1158 = smul.u32 16, %s23
        %p1159 = scmp.lt.s32.totalorder %s1158, 63
        %s1160 = scalar_select %p1159, %s1158, 63
        %s1161 = smul.addr %s1160, 8
        %s1162 = scalar_lea.vmem %s9, %s1161
      $region68: #{binary_classification_forward.1} parent=63 // pred_fallthru
        _
    $region64: #{binary_classification_forward.1} parent=5 // pred_fallthru
      _
  $region6: #{binary_classification_forward.1} parent=0 // loop_footer
    %s21 = sadd.s32 1, %s17
  $region7: #{binary_classification_forward.1} parent=0 // loop_footer_branch
    %16 = sbr.rel target = $region3
  $region8: #{binary_classification_forward.1} parent=0 // loop_exit
    _

</llo_original>
